<compile_context>
chip_gen: v6e
topology: v6e:2x2x1
jax: 0.10.0
libtpu: 0.0.40
codegen_flags: <defaults>
</compile_context>

<pallas_src>
import jax
import jax.numpy as jnp
from jax.experimental import pallas as pl
from jax.experimental.pallas import tpu as pltpu


def _round_up(v: int, m: int) -> int:
    return (v + m - 1) // m * m


def _nam_kernel(x_ref, w1_ref, b1_ref, w2_ref, b2_ref, w3_ref, c_ref):
    """One (feature-group g, batch-tile i) step.

    Shapes inside the kernel (batch lives in the lane dimension):
      x_ref : (1, k, TB)  bf16  packed scalar inputs of the k features in group g
      w1_ref: (1, L, k)   bf16  block-structured scalar->H weights, L = k*H
      b1_ref: (1, L, 1)   f32
      w2_ref: (1, L, L)   bf16  block-diagonal H->H weights
      b2_ref: (1, L, 1)   f32
      w3_ref: (1, k, L)   bf16  block-structured H->1 output weights (no bias)
      c_ref : (1, k, TB)  f32   per-feature contributions for this group / tile
    """
    x = x_ref[0]                                                    # (k, TB) bf16
    h1 = jnp.dot(w1_ref[0], x, preferred_element_type=jnp.float32)  # (L, TB) f32
    h1 = jnp.maximum(h1 + b1_ref[0], 0.0).astype(jnp.bfloat16)
    h2 = jnp.dot(w2_ref[0], h1, preferred_element_type=jnp.float32)  # (L, TB) f32
    h2 = jnp.maximum(h2 + b2_ref[0], 0.0).astype(jnp.bfloat16)
    c_ref[0] = jnp.dot(w3_ref[0], h2, preferred_element_type=jnp.float32)  # (k, TB)


def pack_nam_params(w1, b1, w2, b2, w3, lane_pack=256):
    """Pack per-feature MLP params into k-features-per-`lane_pack`-lane group tiles.

    Call ONCE (hoisted out of the per-batch forward): it materializes dense
    block-diagonal (G, L, L) weights and casts the weight tensors to bf16
    (biases stay f32 and are added in the f32 accumulator).
    """
    F, H = w1.shape
    k = max(1, lane_pack // H)        # feature nets packed per MXU tile width
    G = pl.cdiv(F, k)                 # number of feature groups
    F_pad, L = G * k, k * H
    padF = F_pad - F
    pad = lambda a: jnp.pad(a.astype(jnp.float32),
                            [(0, padF)] + [(0, 0)] * (a.ndim - 1))
    w1p, b1p, w2p, b2p, w3p = map(pad, (w1, b1, w2, b2, w3))
    eye = jnp.eye(k, dtype=jnp.float32)

    # w1t[g, j*H + h, j'] = w1[g*k + j, h] * delta(j, j')
    w1_g = w1p.reshape(G, k, H)
    w1t = (w1_g[:, :, :, None] * eye[None, :, None, :]).reshape(G, L, k)
    b1t = b1p.reshape(G, L, 1)

    # w2t[g, j*H + h', j*H + h] = w2[g*k + j][h, h']   (block diagonal)
    w2_gT = jnp.swapaxes(w2p.reshape(G, k, H, H), 2, 3)             # [g, j, h', h]
    w2t = (w2_gT[:, :, :, None, :] * eye[None, :, None, :, None]).reshape(G, L, L)
    b2t = b2p.reshape(G, L, 1)

    # w3t[g, j', j*H + h] = w3[g*k + j, h] * delta(j, j')
    w3_g = w3p.reshape(G, k, H)
    w3t = (w3_g[:, None, :, :] * eye[None, :, :, None]).reshape(G, k, L)

    bf16 = jnp.bfloat16
    return (w1t.astype(bf16), b1t, w2t.astype(bf16), b2t, w3t.astype(bf16))


@jax.jit
def nam_forward(x, w1t, b1t, w2t, b2t, w3t, bias):
    """NAM forward from pre-packed params.

    x: (B, F) float32.  Returns (outputs (B,), contribs (B, F))."""
    B, F = x.shape
    G, L, k = w1t.shape
    F_pad = G * k

    # Batch lives in the lane dimension: lane-dense 128-multiple tiles, sized up
    # to 2048 to amortize per-grid-step overhead; per-step VMEM stays a few MiB.
    TB = min(2048, _round_up(B, 128))
    B_pad = _round_up(B, TB)

    # x -> (G, k, B_pad) bf16 with xT[g, j, b] = x[b, g*k + j]  (batch in lanes).
    # NOTE: this transpose is one extra (cheap, bf16) pass over x in HBM; feeding
    # natural-layout (TB, k) tiles + an in-kernel transposed contraction would
    # remove it at the cost of a narrow-rhs dot_general.
    x_p = jnp.pad(x.astype(jnp.bfloat16), ((0, B_pad - B), (0, F_pad - F)))
    xT = x_p.reshape(B_pad, G, k).transpose(1, 2, 0)

    contrib_t = pl.pallas_call(
        _nam_kernel,
        out_shape=jax.ShapeDtypeStruct((G, k, B_pad), jnp.float32),
        grid=(G, B_pad // TB),                                  # groups outer, batch inner
        in_specs=[
            pl.BlockSpec((1, k, TB), lambda g, i: (g, 0, i)),   # xT   (batch-tiled)
            pl.BlockSpec((1, L, k), lambda g, i: (g, 0, 0)),    # w1t  (per-group, resident)
            pl.BlockSpec((1, L, 1), lambda g, i: (g, 0, 0)),    # b1t
            pl.BlockSpec((1, L, L), lambda g, i: (g, 0, 0)),    # w2t
            pl.BlockSpec((1, L, 1), lambda g, i: (g, 0, 0)),    # b2t
            pl.BlockSpec((1, k, L), lambda g, i: (g, 0, 0)),    # w3t
        ],
        out_specs=pl.BlockSpec((1, k, TB), lambda g, i: (g, 0, i)),
        compiler_params=pltpu.CompilerParams(
            dimension_semantics=("parallel", "parallel")),
    )(xT, w1t, b1t, w2t, b2t, w3t)

    # (G, k, B_pad) -> (B, F).  Padded features have zero weights -> zero contribution.
    contrib = contrib_t.transpose(2, 0, 1).reshape(B_pad, F_pad)[:B, :F]
    outputs = jnp.sum(contrib, axis=-1) + bias[0]
    return outputs, contrib


def nam_reference(x, w1, b1, w2, b2, w3, bias, operand_dtype=jnp.float32):
    """Pure-JAX reference mirroring the PyTorch forward (per-feature MLPs).

    With operand_dtype=bfloat16 it mirrors the kernel's operand precision
    (bf16 operands, f32 accumulation) so the comparison isolates structure."""
    rnd = lambda a: a.astype(operand_dtype).astype(jnp.float32)
    F = x.shape[1]
    cols = []
    for f in range(F):
        xf = rnd(x[:, f:f + 1])
        h1 = jax.nn.relu(xf * rnd(w1[f])[None, :] + b1[f][None, :])
        h2 = jax.nn.relu(jnp.dot(rnd(h1), rnd(w2[f]),
                                 precision=jax.lax.Precision.HIGHEST)
                         + b2[f][None, :])
        cols.append(jnp.sum(rnd(h2) * rnd(w3[f])[None, :], axis=-1, keepdims=True))
    c = jnp.concatenate(cols, axis=-1)
    return c.sum(-1) + bias[0], c


if __name__ == "__main__":
    # Small shapes consistent with NAM.forward: inputs (batch_size, in_features).
    B, F, H = 8, 4, 32

    key = jax.random.PRNGKey(0)
    kx, k1, kb1, k2, kb2, k3 = jax.random.split(key, 6)

    x = jax.random.normal(kx, (B, F), dtype=jnp.float32)

    # Deterministic synthetic parameters (Kaiming-ish scaling).
    w1 = jax.random.normal(k1, (F, H), dtype=jnp.float32) * (2.0 ** 0.5)        # fan_in = 1
    b1 = jax.random.normal(kb1, (F, H), dtype=jnp.float32) * 0.1
    w2 = jax.random.normal(k2, (F, H, H), dtype=jnp.float32) * (2.0 / H) ** 0.5
    b2 = jax.random.normal(kb2, (F, H), dtype=jnp.float32) * 0.1
    w3 = jax.random.normal(k3, (F, H), dtype=jnp.float32) * (1.0 / H) ** 0.5
    bias = jnp.zeros((1,), dtype=jnp.float32)        # NAM's self.bias = zeros(1)

    # Parameter packing is hoisted out of the per-batch forward (done once).
    packed = pack_nam_params(w1, b1, w2, b2, w3)

    out, contrib = jax.block_until_ready(nam_forward(x, *packed, bias))
    assert out.shape == (B,) and contrib.shape == (B, F)

    # Tight check against a reference with identical operand precision
    # (bf16 operands, f32 accumulation): validates the packing / structure.
    ref_out_bf, ref_c_bf = nam_reference(x, w1, b1, w2, b2, w3, bias,
                                         operand_dtype=jnp.bfloat16)
    assert jnp.allclose(out, ref_out_bf, atol=2e-3, rtol=2e-3)
    assert jnp.allclose(contrib, ref_c_bf, atol=2e-3, rtol=2e-3)

    # Loose check against the full-f32 reference: bounds bf16 operand-rounding drift.
    ref_out_f32, ref_c_f32 = nam_reference(x, w1, b1, w2, b2, w3, bias)
    assert jnp.allclose(out, ref_out_f32, atol=2.5e-1, rtol=1e-1)
    assert jnp.allclose(contrib, ref_c_f32, atol=2.5e-1, rtol=1e-1)

    print("KERNEL_OK")
</pallas_src>

<mosaic_0001>
module attributes {stable_mosaic.version = 11 : i64} {
  func.func @_nam_kernel(%arg0: i32, %arg1: i32, %arg2: memref<1x8x128xbf16, #tpu.memory_space<vmem>>, %arg3: memref<1x256x8xbf16, #tpu.memory_space<vmem>>, %arg4: memref<1x256x1xf32, #tpu.memory_space<vmem>>, %arg5: memref<1x256x256xbf16, #tpu.memory_space<vmem>>, %arg6: memref<1x256x1xf32, #tpu.memory_space<vmem>>, %arg7: memref<1x8x256xbf16, #tpu.memory_space<vmem>>, %arg8: memref<1x8x128xf32, #tpu.memory_space<vmem>>) attributes {dimension_semantics = [#tpu.dimension_semantics<parallel>, #tpu.dimension_semantics<parallel>], iteration_bounds = array<i64: 1, 1>, scalar_prefetch = 0 : i64, scratch_operands = 0 : i64, tpu.core_type = #tpu.core_type<tc>, window_params = [{transform_indices = @transform_0, window_bounds = array<i64: 1, 8, 128>}, {transform_indices = @transform_1, window_bounds = array<i64: 1, 256, 8>}, {transform_indices = @transform_2, window_bounds = array<i64: 1, 256, 1>}, {transform_indices = @transform_3, window_bounds = array<i64: 1, 256, 256>}, {transform_indices = @transform_4, window_bounds = array<i64: 1, 256, 1>}, {transform_indices = @transform_5, window_bounds = array<i64: 1, 8, 256>}, {transform_indices = @transform_6, window_bounds = array<i64: 1, 8, 128>}]} {
    %c0 = arith.constant 0 : index
    %c0_0 = arith.constant 0 : index
    %c0_1 = arith.constant 0 : index
    %0 = vector.load %arg2[%c0, %c0_0, %c0_1] : memref<1x8x128xbf16, #tpu.memory_space<vmem>>, vector<1x8x128xbf16>
    %1 = vector.shape_cast %0 : vector<1x8x128xbf16> to vector<8x128xbf16>
    %c0_2 = arith.constant 0 : index
    %c0_3 = arith.constant 0 : index
    %c0_4 = arith.constant 0 : index
    %2 = vector.load %arg3[%c0_2, %c0_3, %c0_4] : memref<1x256x8xbf16, #tpu.memory_space<vmem>>, vector<1x256x8xbf16>
    %3 = vector.shape_cast %2 : vector<1x256x8xbf16> to vector<256x8xbf16>
    %cst = arith.constant dense<0.000000e+00> : vector<256x128xf32>
    %4 = tpu.matmul %3, %1, %cst {dimension_numbers = #tpu.dot_dimension_numbers<[1], [0], [0], [1], [0, 0, 1, 1], [], []>} : vector<256x8xbf16>, vector<8x128xbf16>, vector<256x128xf32> -> vector<256x128xf32>
    %c0_5 = arith.constant 0 : index
    %c0_6 = arith.constant 0 : index
    %c0_7 = arith.constant 0 : index
    %5 = vector.load %arg4[%c0_5, %c0_6, %c0_7] : memref<1x256x1xf32, #tpu.memory_space<vmem>>, vector<1x256x1xf32>
    %6 = vector.shape_cast %5 : vector<1x256x1xf32> to vector<256x1xf32>
    %7 = vector.broadcast %6 : vector<256x1xf32> to vector<256x128xf32>
    %8 = arith.addf %4, %7 : vector<256x128xf32>
    %cst_8 = arith.constant 0.000000e+00 : f32
    %9 = vector.broadcast %cst_8 : f32 to vector<256x128xf32>
    %10 = arith.maximumf %8, %9 : vector<256x128xf32>
    %11 = arith.truncf %10 : vector<256x128xf32> to vector<256x128xbf16>
    %c0_9 = arith.constant 0 : index
    %c0_10 = arith.constant 0 : index
    %c0_11 = arith.constant 0 : index
    %12 = vector.load %arg5[%c0_9, %c0_10, %c0_11] : memref<1x256x256xbf16, #tpu.memory_space<vmem>>, vector<1x256x256xbf16>
    %13 = vector.shape_cast %12 : vector<1x256x256xbf16> to vector<256x256xbf16>
    %cst_12 = arith.constant dense<0.000000e+00> : vector<256x128xf32>
    %14 = tpu.matmul %13, %11, %cst_12 {dimension_numbers = #tpu.dot_dimension_numbers<[1], [0], [0], [1], [0, 0, 1, 1], [], []>} : vector<256x256xbf16>, vector<256x128xbf16>, vector<256x128xf32> -> vector<256x128xf32>
    %c0_13 = arith.constant 0 : index
    %c0_14 = arith.constant 0 : index
    %c0_15 = arith.constant 0 : index
    %15 = vector.load %arg6[%c0_13, %c0_14, %c0_15] : memref<1x256x1xf32, #tpu.memory_space<vmem>>, vector<1x256x1xf32>
    %16 = vector.shape_cast %15 : vector<1x256x1xf32> to vector<256x1xf32>
    %17 = vector.broadcast %16 : vector<256x1xf32> to vector<256x128xf32>
    %18 = arith.addf %14, %17 : vector<256x128xf32>
    %cst_16 = arith.constant 0.000000e+00 : f32
    %19 = vector.broadcast %cst_16 : f32 to vector<256x128xf32>
    %20 = arith.maximumf %18, %19 : vector<256x128xf32>
    %21 = arith.truncf %20 : vector<256x128xf32> to vector<256x128xbf16>
    %c0_17 = arith.constant 0 : index
    %c0_18 = arith.constant 0 : index
    %c0_19 = arith.constant 0 : index
    %22 = vector.load %arg7[%c0_17, %c0_18, %c0_19] : memref<1x8x256xbf16, #tpu.memory_space<vmem>>, vector<1x8x256xbf16>
    %23 = vector.shape_cast %22 : vector<1x8x256xbf16> to vector<8x256xbf16>
    %cst_20 = arith.constant dense<0.000000e+00> : vector<8x128xf32>
    %24 = tpu.matmul %23, %21, %cst_20 {dimension_numbers = #tpu.dot_dimension_numbers<[1], [0], [0], [1], [0, 0, 1, 1], [], []>} : vector<8x256xbf16>, vector<256x128xbf16>, vector<8x128xf32> -> vector<8x128xf32>
    %c0_21 = arith.constant 0 : index
    %c0_22 = arith.constant 0 : index
    %c0_23 = arith.constant 0 : index
    %25 = vector.load %arg8[%c0_21, %c0_22, %c0_23] : memref<1x8x128xf32, #tpu.memory_space<vmem>>, vector<1x8x128xf32>
    %26 = vector.shape_cast %25 : vector<1x8x128xf32> to vector<8x128xf32>
    %27 = vector.shape_cast %24 : vector<8x128xf32> to vector<1x8x128xf32>
    tpu.vector_store %arg8[%c0_21, %c0_22, %c0_23], %27 {strides = array<i32>} : memref<1x8x128xf32, #tpu.memory_space<vmem>>, vector<1x8x128xf32>,
    return
  }
  func.func @transform_0(%arg0: i32, %arg1: i32) -> (i32, i32, i32) {
    %c0_i32 = arith.constant 0 : i32
    %c0_i32_0 = arith.constant 0 : i32
    return %arg0, %c0_i32, %arg1 : i32, i32, i32
  }
  func.func @transform_1(%arg0: i32, %arg1: i32) -> (i32, i32, i32) {
    %c0_i32 = arith.constant 0 : i32
    %c0_i32_0 = arith.constant 0 : i32
    %c0_i32_1 = arith.constant 0 : i32
    return %arg0, %c0_i32, %c0_i32_0 : i32, i32, i32
  }
  func.func @transform_2(%arg0: i32, %arg1: i32) -> (i32, i32, i32) {
    %c0_i32 = arith.constant 0 : i32
    %c0_i32_0 = arith.constant 0 : i32
    %c0_i32_1 = arith.constant 0 : i32
    return %arg0, %c0_i32, %c0_i32_0 : i32, i32, i32
  }
  func.func @transform_3(%arg0: i32, %arg1: i32) -> (i32, i32, i32) {
    %c0_i32 = arith.constant 0 : i32
    %c0_i32_0 = arith.constant 0 : i32
    %c0_i32_1 = arith.constant 0 : i32
    return %arg0, %c0_i32, %c0_i32_0 : i32, i32, i32
  }
  func.func @transform_4(%arg0: i32, %arg1: i32) -> (i32, i32, i32) {
    %c0_i32 = arith.constant 0 : i32
    %c0_i32_0 = arith.constant 0 : i32
    %c0_i32_1 = arith.constant 0 : i32
    return %arg0, %c0_i32, %c0_i32_0 : i32, i32, i32
  }
  func.func @transform_5(%arg0: i32, %arg1: i32) -> (i32, i32, i32) {
    %c0_i32 = arith.constant 0 : i32
    %c0_i32_0 = arith.constant 0 : i32
    %c0_i32_1 = arith.constant 0 : i32
    return %arg0, %c0_i32, %c0_i32_0 : i32, i32, i32
  }
  func.func @transform_6(%arg0: i32, %arg1: i32) -> (i32, i32, i32) {
    %c0_i32 = arith.constant 0 : i32
    %c0_i32_0 = arith.constant 0 : i32
    return %arg0, %c0_i32, %arg1 : i32, i32, i32
  }
}

</mosaic_0001>

<llo_original>
// kernel: nam_forward.1
$region0: #{nam_forward.1}
  #allocation0 [shape = 'u32[]', space=smem, size = 0x4, offset = 0x4, fixed_abs, tag = 'smem constant byte address 0x4 - core index']
  #allocation1 [shape = 'u32[144,128]{1,0:T(1,128)}', space=vmem, size = 0x12000, scoped, tag = 'internal scratch']
  %s0 = inlined_call_operand.vmem [shape: bf16[1,8,128], index: 0, kind: input, shape index: {}]
  %s1 = inlined_call_operand.vmem [shape: bf16[1,256,8], index: 1, kind: input, shape index: {}]
  %s2 = inlined_call_operand.vmem [shape: f32[1,256,1], index: 2, kind: input, shape index: {}]
  %s3 = inlined_call_operand.vmem [shape: bf16[1,256,256], index: 3, kind: input, shape index: {}]
  %s4 = inlined_call_operand.vmem [shape: f32[1,256,1], index: 4, kind: input, shape index: {}]
  %s5 = inlined_call_operand.vmem [shape: bf16[1,8,256], index: 5, kind: input, shape index: {}]
  %s6 = inlined_call_operand.vmem [shape: f32[1,8,128], index: 6, kind: output, shape index: {}]
  %s7 = sld [smem:[#allocation0]]
  $region34: #{nam_forward.1} parent=0
    _
  %s9 = ssub.s32 1, %s7
  %s10 = scalar_select 0, %s9, %s7
  // Predicated region
  $region2: #{nam_forward.1} parent=0 // pred_check
    _
  $region3: #{nam_forward.1} parent=0 // pred_check_branch
    %12 = sbr.rel (0) target = $region5
  $region4: #{nam_forward.1} parent=0 // pred_region
    _
  $region5: #{nam_forward.1} parent=0 // pred_fallthru
    _
  // Predicated region
  $region6: #{nam_forward.1} parent=0 // pred_check
    _
  $region7: #{nam_forward.1} parent=0 // pred_check_branch
    %14 = sbr.rel (0) target = $region9
  $region8: #{nam_forward.1} parent=0 // pred_region
    _
  $region9: #{nam_forward.1} parent=0 // pred_fallthru
    _
  // Predicated region
  $region10: #{nam_forward.1} parent=0 // pred_check
    _
  $region11: #{nam_forward.1} parent=0 // pred_check_branch
    %16 = sbr.rel (0) target = $region13
  $region12: #{nam_forward.1} parent=0 // pred_region
    _
  $region13: #{nam_forward.1} parent=0 // pred_fallthru
    _
  // Predicated region
  $region14: #{nam_forward.1} parent=0 // pred_check
    _
  $region15: #{nam_forward.1} parent=0 // pred_check_branch
    %18 = sbr.rel (0) target = $region17
  $region16: #{nam_forward.1} parent=0 // pred_region
    _
  $region17: #{nam_forward.1} parent=0 // pred_fallthru
    _
  // Predicated region
  $region18: #{nam_forward.1} parent=0 // pred_check
    _
  $region19: #{nam_forward.1} parent=0 // pred_check_branch
    %20 = sbr.rel (0) target = $region21
  $region20: #{nam_forward.1} parent=0 // pred_region
    _
  $region21: #{nam_forward.1} parent=0 // pred_fallthru
    _
  // Predicated region
  $region22: #{nam_forward.1} parent=0 // pred_check
    _
  $region23: #{nam_forward.1} parent=0 // pred_check_branch
    %22 = sbr.rel (0) target = $region25
  $region24: #{nam_forward.1} parent=0 // pred_region
    _
  $region25: #{nam_forward.1} parent=0 // pred_fallthru
    _
  %v24 = vld [vmem:[%s0] sm:$0xf]
  %v25 = vld [vmem:[%s1] sm:$0xf]
  %v26 = vld [vmem:[%s1 + $0x4] sm:$0xf]
  %v27 = vld [vmem:[%s1 + $0x8] sm:$0xf]
  %v28 = vld [vmem:[%s1 + $0xc] sm:$0xf]
  %v29 = vld [vmem:[%s1 + $0x10] sm:$0xf]
  %v30 = vld [vmem:[%s1 + $0x14] sm:$0xf]
  %v31 = vld [vmem:[%s1 + $0x18] sm:$0xf]
  %v32 = vld [vmem:[%s1 + $0x1c] sm:$0xf]
  %v33 = vld [vmem:[%s1 + $0x20] sm:$0xf]
  %v34 = vld [vmem:[%s1 + $0x24] sm:$0xf]
  %v35 = vld [vmem:[%s1 + $0x28] sm:$0xf]
  %v36 = vld [vmem:[%s1 + $0x2c] sm:$0xf]
  %v37 = vld [vmem:[%s1 + $0x30] sm:$0xf]
  %v38 = vld [vmem:[%s1 + $0x34] sm:$0xf]
  %v39 = vld [vmem:[%s1 + $0x38] sm:$0xf]
  %v40 = vld [vmem:[%s1 + $0x3c] sm:$0xf]
  %v41 = vld [vmem:[%s1 + $0x40] sm:$0xf]
  %v42 = vld [vmem:[%s1 + $0x44] sm:$0xf]
  %v43 = vld [vmem:[%s1 + $0x48] sm:$0xf]
  %v44 = vld [vmem:[%s1 + $0x4c] sm:$0xf]
  %v45 = vld [vmem:[%s1 + $0x50] sm:$0xf]
  %v46 = vld [vmem:[%s1 + $0x54] sm:$0xf]
  %v47 = vld [vmem:[%s1 + $0x58] sm:$0xf]
  %v48 = vld [vmem:[%s1 + $0x5c] sm:$0xf]
  %v49 = vld [vmem:[%s1 + $0x60] sm:$0xf]
  %v50 = vld [vmem:[%s1 + $0x64] sm:$0xf]
  %v51 = vld [vmem:[%s1 + $0x68] sm:$0xf]
  %v52 = vld [vmem:[%s1 + $0x6c] sm:$0xf]
  %v53 = vld [vmem:[%s1 + $0x70] sm:$0xf]
  %v54 = vld [vmem:[%s1 + $0x74] sm:$0xf]
  %v55 = vld [vmem:[%s1 + $0x78] sm:$0xf]
  %v56 = vld [vmem:[%s1 + $0x7c] sm:$0xf]
  %v57 = vld [vmem:[%s2] sm:$0xff]
  %v58 = vld [vmem:[%s2 + $0x8] sm:$0xff]
  %v59 = vld [vmem:[%s2 + $0x10] sm:$0xff]
  %v60 = vld [vmem:[%s2 + $0x18] sm:$0xff]
  %v61 = vld [vmem:[%s2 + $0x20] sm:$0xff]
  %v62 = vld [vmem:[%s2 + $0x28] sm:$0xff]
  %v63 = vld [vmem:[%s2 + $0x30] sm:$0xff]
  %v64 = vld [vmem:[%s2 + $0x38] sm:$0xff]
  %v65 = vld [vmem:[%s2 + $0x40] sm:$0xff]
  %v66 = vld [vmem:[%s2 + $0x48] sm:$0xff]
  %v67 = vld [vmem:[%s2 + $0x50] sm:$0xff]
  %v68 = vld [vmem:[%s2 + $0x58] sm:$0xff]
  %v69 = vld [vmem:[%s2 + $0x60] sm:$0xff]
  %v70 = vld [vmem:[%s2 + $0x68] sm:$0xff]
  %v71 = vld [vmem:[%s2 + $0x70] sm:$0xff]
  %v72 = vld [vmem:[%s2 + $0x78] sm:$0xff]
  %v73 = vld [vmem:[%s2 + $0x80] sm:$0xff]
  %v74 = vld [vmem:[%s2 + $0x88] sm:$0xff]
  %v75 = vld [vmem:[%s2 + $0x90] sm:$0xff]
  %v76 = vld [vmem:[%s2 + $0x98] sm:$0xff]
  %v77 = vld [vmem:[%s2 + $0xa0] sm:$0xff]
  %v78 = vld [vmem:[%s2 + $0xa8] sm:$0xff]
  %v79 = vld [vmem:[%s2 + $0xb0] sm:$0xff]
  %v80 = vld [vmem:[%s2 + $0xb8] sm:$0xff]
  %v81 = vld [vmem:[%s2 + $0xc0] sm:$0xff]
  %v82 = vld [vmem:[%s2 + $0xc8] sm:$0xff]
  %v83 = vld [vmem:[%s2 + $0xd0] sm:$0xff]
  %v84 = vld [vmem:[%s2 + $0xd8] sm:$0xff]
  %v85 = vld [vmem:[%s2 + $0xe0] sm:$0xff]
  %v86 = vld [vmem:[%s2 + $0xe8] sm:$0xff]
  %v87 = vld [vmem:[%s2 + $0xf0] sm:$0xff]
  %v88 = vld [vmem:[%s2 + $0xf8] sm:$0xff]
  %90 = vset.pattern.permute.xlu0 0
  %91 = vperm.xlu0 %90, %v57
  %v92 = vpop.permute.xlu0 %91
  %95 = vset.pattern.permute.xlu0 0
  %96 = vperm.xlu0 %95, %v58
  %v97 = vpop.permute.xlu0 %96
  %100 = vset.pattern.permute.xlu0 0
  %101 = vperm.xlu0 %100, %v59
  %v102 = vpop.permute.xlu0 %101
  %105 = vset.pattern.permute.xlu0 0
  %106 = vperm.xlu0 %105, %v60
  %v107 = vpop.permute.xlu0 %106
  %110 = vset.pattern.permute.xlu0 0
  %111 = vperm.xlu0 %110, %v61
  %v112 = vpop.permute.xlu0 %111
  %115 = vset.pattern.permute.xlu0 0
  %116 = vperm.xlu0 %115, %v62
  %v117 = vpop.permute.xlu0 %116
  %120 = vset.pattern.permute.xlu0 0
  %121 = vperm.xlu0 %120, %v63
  %v122 = vpop.permute.xlu0 %121
  %125 = vset.pattern.permute.xlu0 0
  %126 = vperm.xlu0 %125, %v64
  %v127 = vpop.permute.xlu0 %126
  %130 = vset.pattern.permute.xlu0 0
  %131 = vperm.xlu0 %130, %v65
  %v132 = vpop.permute.xlu0 %131
  %135 = vset.pattern.permute.xlu0 0
  %136 = vperm.xlu0 %135, %v66
  %v137 = vpop.permute.xlu0 %136
  %140 = vset.pattern.permute.xlu0 0
  %141 = vperm.xlu0 %140, %v67
  %v142 = vpop.permute.xlu0 %141
  %145 = vset.pattern.permute.xlu0 0
  %146 = vperm.xlu0 %145, %v68
  %v147 = vpop.permute.xlu0 %146
  %150 = vset.pattern.permute.xlu0 0
  %151 = vperm.xlu0 %150, %v69
  %v152 = vpop.permute.xlu0 %151
  %155 = vset.pattern.permute.xlu0 0
  %156 = vperm.xlu0 %155, %v70
  %v157 = vpop.permute.xlu0 %156
  %160 = vset.pattern.permute.xlu0 0
  %161 = vperm.xlu0 %160, %v71
  %v162 = vpop.permute.xlu0 %161
  %165 = vset.pattern.permute.xlu0 0
  %166 = vperm.xlu0 %165, %v72
  %v167 = vpop.permute.xlu0 %166
  %170 = vset.pattern.permute.xlu0 0
  %171 = vperm.xlu0 %170, %v73
  %v172 = vpop.permute.xlu0 %171
  %175 = vset.pattern.permute.xlu0 0
  %176 = vperm.xlu0 %175, %v74
  %v177 = vpop.permute.xlu0 %176
  %180 = vset.pattern.permute.xlu0 0
  %181 = vperm.xlu0 %180, %v75
  %v182 = vpop.permute.xlu0 %181
  %185 = vset.pattern.permute.xlu0 0
  %186 = vperm.xlu0 %185, %v76
  %v187 = vpop.permute.xlu0 %186
  %190 = vset.pattern.permute.xlu0 0
  %191 = vperm.xlu0 %190, %v77
  %v192 = vpop.permute.xlu0 %191
  %195 = vset.pattern.permute.xlu0 0
  %196 = vperm.xlu0 %195, %v78
  %v197 = vpop.permute.xlu0 %196
  %200 = vset.pattern.permute.xlu0 0
  %201 = vperm.xlu0 %200, %v79
  %v202 = vpop.permute.xlu0 %201
  %205 = vset.pattern.permute.xlu0 0
  %206 = vperm.xlu0 %205, %v80
  %v207 = vpop.permute.xlu0 %206
  %210 = vset.pattern.permute.xlu0 0
  %211 = vperm.xlu0 %210, %v81
  %v212 = vpop.permute.xlu0 %211
  %215 = vset.pattern.permute.xlu0 0
  %216 = vperm.xlu0 %215, %v82
  %v217 = vpop.permute.xlu0 %216
  %220 = vset.pattern.permute.xlu0 0
  %221 = vperm.xlu0 %220, %v83
  %v222 = vpop.permute.xlu0 %221
  %225 = vset.pattern.permute.xlu0 0
  %226 = vperm.xlu0 %225, %v84
  %v227 = vpop.permute.xlu0 %226
  %230 = vset.pattern.permute.xlu0 0
  %231 = vperm.xlu0 %230, %v85
  %v232 = vpop.permute.xlu0 %231
  %235 = vset.pattern.permute.xlu0 0
  %236 = vperm.xlu0 %235, %v86
  %v237 = vpop.permute.xlu0 %236
  %240 = vset.pattern.permute.xlu0 0
  %241 = vperm.xlu0 %240, %v87
  %v242 = vpop.permute.xlu0 %241
  %245 = vset.pattern.permute.xlu0 0
  %246 = vperm.xlu0 %245, %v88
  %v247 = vpop.permute.xlu0 %246
  %v281 = vunpack.c.l.b16 %v25
  %v282 = vunpack.c.l.b16 %v26
  %v283 = vunpack.c.l.b16 %v27
  %v284 = vunpack.c.l.b16 %v28
  %v285 = vunpack.c.l.b16 %v29
  %v286 = vunpack.c.l.b16 %v30
  %v287 = vunpack.c.l.b16 %v31
  %v288 = vunpack.c.l.b16 %v32
  %v289 = vunpack.c.l.b16 %v33
  %v290 = vunpack.c.l.b16 %v34
  %v291 = vunpack.c.l.b16 %v35
  %v292 = vunpack.c.l.b16 %v36
  %v293 = vunpack.c.l.b16 %v37
  %v294 = vunpack.c.l.b16 %v38
  %v295 = vunpack.c.l.b16 %v39
  %v296 = vunpack.c.l.b16 %v40
  %v297 = vunpack.c.l.b16 %v41
  %v298 = vunpack.c.l.b16 %v42
  %v299 = vunpack.c.l.b16 %v43
  %v300 = vunpack.c.l.b16 %v44
  %v301 = vunpack.c.l.b16 %v45
  %v302 = vunpack.c.l.b16 %v46
  %v303 = vunpack.c.l.b16 %v47
  %v304 = vunpack.c.l.b16 %v48
  %v305 = vunpack.c.l.b16 %v49
  %v306 = vunpack.c.l.b16 %v50
  %v307 = vunpack.c.l.b16 %v51
  %v308 = vunpack.c.l.b16 %v52
  %v309 = vunpack.c.l.b16 %v53
  %v310 = vunpack.c.l.b16 %v54
  %v311 = vunpack.c.l.b16 %v55
  %v312 = vunpack.c.l.b16 %v56
  %v313 = vpack.c.b16 %v282, %v281
  %v314 = vpack.c.b16 %v284, %v283
  %v315 = vpack.c.b16 %v286, %v285
  %v316 = vpack.c.b16 %v288, %v287
  %v317 = vpack.c.b16 %v290, %v289
  %v318 = vpack.c.b16 %v292, %v291
  %v319 = vpack.c.b16 %v294, %v293
  %v320 = vpack.c.b16 %v296, %v295
  %v321 = vpack.c.b16 %v298, %v297
  %v322 = vpack.c.b16 %v300, %v299
  %v323 = vpack.c.b16 %v302, %v301
  %v324 = vpack.c.b16 %v304, %v303
  %v325 = vpack.c.b16 %v306, %v305
  %v326 = vpack.c.b16 %v308, %v307
  %v327 = vpack.c.b16 %v310, %v309
  %v328 = vpack.c.b16 %v312, %v311
  %vm329 = vcmask 64512
  %v331 = vsel %vm329, %v313, 0
  %v334 = vsel %vm329, %v314, 0
  %v337 = vsel %vm329, %v315, 0
  %v340 = vsel %vm329, %v316, 0
  %v343 = vsel %vm329, %v317, 0
  %v346 = vsel %vm329, %v318, 0
  %v349 = vsel %vm329, %v319, 0
  %v352 = vsel %vm329, %v320, 0
  %v355 = vsel %vm329, %v321, 0
  %v358 = vsel %vm329, %v322, 0
  %v361 = vsel %vm329, %v323, 0
  %v364 = vsel %vm329, %v324, 0
  %v367 = vsel %vm329, %v325, 0
  %v370 = vsel %vm329, %v326, 0
  %v373 = vsel %vm329, %v327, 0
  %v376 = vsel %vm329, %v328, 0
  %vm378 = vcmask 1043456
  %v380 = vsel %vm378, %v24, 0
  %382 = vmatprep.subr.bf16.mxu0 0
  %383 = vmatpush1.bf16.msra.mxu0 0
  %384 = vmatprep.subr.bf16.mxu0 0
  %385 = vmatpush1.bf16.msra.mxu0 0
  %386 = vmatprep.subr.bf16.mxu0 0
  %387 = vmatpush1.bf16.msra.mxu0 0
  %388 = vmatprep.subr.bf16.mxu0 0
  %389 = vmatpush1.bf16.msra.mxu0 0
  %390 = vmatprep.subr.bf16.mxu0 0
  %391 = vmatpush1.bf16.msra.mxu0 0
  %392 = vmatprep.subr.bf16.mxu0 0
  %393 = vmatpush1.bf16.msra.mxu0 0
  %394 = vmatprep.subr.bf16.mxu0 0
  %395 = vmatpush1.bf16.msra.mxu0 0
  %396 = vmatprep.subr.bf16.mxu0 0
  %397 = vmatpush1.bf16.msra.mxu0 %v380
  %398 = vmatprep.subr.bf16.mxu0 0
  %399 = vmatpush2.bf16.msra.mxu0 0
  %400 = vmatprep.subr.bf16.mxu0 0
  %401 = vmatpush2.bf16.msra.mxu0 0
  %402 = vmatprep.subr.bf16.mxu0 0
  %403 = vmatpush2.bf16.msra.mxu0 0
  %404 = vmatprep.subr.bf16.mxu0 0
  %405 = vmatpush2.bf16.msra.mxu0 0
  %406 = vmatprep.subr.bf16.mxu0 0
  %407 = vmatpush2.bf16.msra.mxu0 0
  %408 = vmatprep.subr.bf16.mxu0 0
  %409 = vmatpush2.bf16.msra.mxu0 0
  %410 = vmatprep.subr.bf16.mxu0 0
  %411 = vmatpush2.bf16.msra.mxu0 0
  %412 = vmatprep.subr.bf16.mxu0 0
  %413 = vmatpush2.bf16.msra.mxu0 0
  %414 = vmatprep.mubr.bf16.mxu0 0
  %415 = vmatmul.mubr.bf16.gmra.mxu0 %v331
  %v416 = vpop.f32.mrf.mxu0
  %v417 = vadd.f32 %v92, %v416
  %v418 = vpop.f32.mrf.mxu0
  %v419 = vpop.f32.mrf.mxu0
  %v420 = vadd.f32 %v97, %v419
  %v421 = vpop.f32.mrf.mxu0
  %422 = vmatprep.mubr.bf16.mxu0 0
  %423 = vmatmul.mubr.bf16.gmra.mxu0 %v334
  %v424 = vpop.f32.mrf.mxu0
  %v425 = vadd.f32 %v102, %v424
  %v426 = vpop.f32.mrf.mxu0
  %v427 = vpop.f32.mrf.mxu0
  %v428 = vadd.f32 %v107, %v427
  %v429 = vpop.f32.mrf.mxu0
  %430 = vmatprep.mubr.bf16.mxu0 0
  %431 = vmatmul.mubr.bf16.gmra.mxu0 %v337
  %v432 = vpop.f32.mrf.mxu0
  %v433 = vadd.f32 %v112, %v432
  %v434 = vpop.f32.mrf.mxu0
  %v435 = vpop.f32.mrf.mxu0
  %v436 = vadd.f32 %v117, %v435
  %v437 = vpop.f32.mrf.mxu0
  %438 = vmatprep.mubr.bf16.mxu0 0
  %439 = vmatmul.mubr.bf16.gmra.mxu0 %v340
  %v440 = vpop.f32.mrf.mxu0
  %v441 = vadd.f32 %v122, %v440
  %v442 = vpop.f32.mrf.mxu0
  %v443 = vpop.f32.mrf.mxu0
  %v444 = vadd.f32 %v127, %v443
  %v445 = vpop.f32.mrf.mxu0
  %446 = vmatprep.mubr.bf16.mxu0 0
  %447 = vmatmul.mubr.bf16.gmra.mxu0 %v343
  %v448 = vpop.f32.mrf.mxu0
  %v449 = vadd.f32 %v132, %v448
  %v450 = vpop.f32.mrf.mxu0
  %v451 = vpop.f32.mrf.mxu0
  %v452 = vadd.f32 %v137, %v451
  %v453 = vpop.f32.mrf.mxu0
  %454 = vmatprep.mubr.bf16.mxu0 0
  %455 = vmatmul.mubr.bf16.gmra.mxu0 %v346
  %v456 = vpop.f32.mrf.mxu0
  %v457 = vadd.f32 %v142, %v456
  %v458 = vpop.f32.mrf.mxu0
  %v459 = vpop.f32.mrf.mxu0
  %v460 = vadd.f32 %v147, %v459
  %v461 = vpop.f32.mrf.mxu0
  %462 = vmatprep.mubr.bf16.mxu0 0
  %463 = vmatmul.mubr.bf16.gmra.mxu0 %v349
  %v464 = vpop.f32.mrf.mxu0
  %v465 = vadd.f32 %v152, %v464
  %v466 = vpop.f32.mrf.mxu0
  %v467 = vpop.f32.mrf.mxu0
  %v468 = vadd.f32 %v157, %v467
  %v469 = vpop.f32.mrf.mxu0
  %470 = vmatprep.mubr.bf16.mxu0 0
  %471 = vmatmul.mubr.bf16.gmra.mxu0 %v352
  %v472 = vpop.f32.mrf.mxu0
  %v473 = vadd.f32 %v162, %v472
  %v474 = vpop.f32.mrf.mxu0
  %v475 = vpop.f32.mrf.mxu0
  %v476 = vadd.f32 %v167, %v475
  %v477 = vpop.f32.mrf.mxu0
  %478 = vmatprep.mubr.bf16.mxu0 0
  %479 = vmatmul.mubr.bf16.gmra.mxu0 %v355
  %v480 = vpop.f32.mrf.mxu0
  %v481 = vadd.f32 %v172, %v480
  %v482 = vpop.f32.mrf.mxu0
  %v483 = vpop.f32.mrf.mxu0
  %v484 = vadd.f32 %v177, %v483
  %v485 = vpop.f32.mrf.mxu0
  %486 = vmatprep.mubr.bf16.mxu0 0
  %487 = vmatmul.mubr.bf16.gmra.mxu0 %v358
  %v488 = vpop.f32.mrf.mxu0
  %v489 = vadd.f32 %v182, %v488
  %v490 = vpop.f32.mrf.mxu0
  %v491 = vpop.f32.mrf.mxu0
  %v492 = vadd.f32 %v187, %v491
  %v493 = vpop.f32.mrf.mxu0
  %494 = vmatprep.mubr.bf16.mxu0 0
  %495 = vmatmul.mubr.bf16.gmra.mxu0 %v361
  %v496 = vpop.f32.mrf.mxu0
  %v497 = vadd.f32 %v192, %v496
  %v498 = vpop.f32.mrf.mxu0
  %v499 = vpop.f32.mrf.mxu0
  %v500 = vadd.f32 %v197, %v499
  %v501 = vpop.f32.mrf.mxu0
  %502 = vmatprep.mubr.bf16.mxu0 0
  %503 = vmatmul.mubr.bf16.gmra.mxu0 %v364
  %v504 = vpop.f32.mrf.mxu0
  %v505 = vadd.f32 %v202, %v504
  %v506 = vpop.f32.mrf.mxu0
  %v507 = vpop.f32.mrf.mxu0
  %v508 = vadd.f32 %v207, %v507
  %v509 = vpop.f32.mrf.mxu0
  %510 = vmatprep.mubr.bf16.mxu0 0
  %511 = vmatmul.mubr.bf16.gmra.mxu0 %v367
  %v512 = vpop.f32.mrf.mxu0
  %v513 = vadd.f32 %v212, %v512
  %v514 = vpop.f32.mrf.mxu0
  %v515 = vpop.f32.mrf.mxu0
  %v516 = vadd.f32 %v217, %v515
  %v517 = vpop.f32.mrf.mxu0
  %518 = vmatprep.mubr.bf16.mxu0 0
  %519 = vmatmul.mubr.bf16.gmra.mxu0 %v370
  %v520 = vpop.f32.mrf.mxu0
  %v521 = vadd.f32 %v222, %v520
  %v522 = vpop.f32.mrf.mxu0
  %v523 = vpop.f32.mrf.mxu0
  %v524 = vadd.f32 %v227, %v523
  %v525 = vpop.f32.mrf.mxu0
  %526 = vmatprep.mubr.bf16.mxu0 0
  %527 = vmatmul.mubr.bf16.gmra.mxu0 %v373
  %v528 = vpop.f32.mrf.mxu0
  %v529 = vadd.f32 %v232, %v528
  %v530 = vpop.f32.mrf.mxu0
  %v531 = vpop.f32.mrf.mxu0
  %v532 = vadd.f32 %v237, %v531
  %v533 = vpop.f32.mrf.mxu0
  %534 = vmatprep.mubr.bf16.mxu0 0
  %535 = vmatmul.mubr.bf16.gmra.mxu0 %v376
  %v536 = vpop.f32.mrf.mxu0
  %v537 = vadd.f32 %v242, %v536
  %v538 = vpop.f32.mrf.mxu0
  %v539 = vpop.f32.mrf.mxu0
  %v540 = vadd.f32 %v247, %v539
  %v541 = vpop.f32.mrf.mxu0
  %542 = vdwg.mxu0
  %v543 = vmax.f32 %v417, 0.0
  %v544 = vmax.f32 %v420, 0.0
  %v545 = vmax.f32 %v425, 0.0
  %v546 = vmax.f32 %v428, 0.0
  %v547 = vmax.f32 %v433, 0.0
  %v548 = vmax.f32 %v436, 0.0
  %v549 = vmax.f32 %v441, 0.0
  %v550 = vmax.f32 %v444, 0.0
  %v551 = vmax.f32 %v449, 0.0
  %v552 = vmax.f32 %v452, 0.0
  %v553 = vmax.f32 %v457, 0.0
  %v554 = vmax.f32 %v460, 0.0
  %v555 = vmax.f32 %v465, 0.0
  %v556 = vmax.f32 %v468, 0.0
  %v557 = vmax.f32 %v473, 0.0
  %v558 = vmax.f32 %v476, 0.0
  %v559 = vmax.f32 %v481, 0.0
  %v560 = vmax.f32 %v484, 0.0
  %v561 = vmax.f32 %v489, 0.0
  %v562 = vmax.f32 %v492, 0.0
  %v563 = vmax.f32 %v497, 0.0
  %v564 = vmax.f32 %v500, 0.0
  %v565 = vmax.f32 %v505, 0.0
  %v566 = vmax.f32 %v508, 0.0
  %v567 = vmax.f32 %v513, 0.0
  %v568 = vmax.f32 %v516, 0.0
  %v569 = vmax.f32 %v521, 0.0
  %v570 = vmax.f32 %v524, 0.0
  %v571 = vmax.f32 %v529, 0.0
  %v572 = vmax.f32 %v532, 0.0
  %v573 = vmax.f32 %v537, 0.0
  %v574 = vmax.f32 %v540, 0.0
  %v575 = vpack.c.bf16 %v544, %v543
  %v576 = vpack.c.bf16 %v546, %v545
  %v577 = vpack.c.bf16 %v548, %v547
  %v578 = vpack.c.bf16 %v550, %v549
  %v579 = vpack.c.bf16 %v552, %v551
  %v580 = vpack.c.bf16 %v554, %v553
  %v581 = vpack.c.bf16 %v556, %v555
  %v582 = vpack.c.bf16 %v558, %v557
  %v583 = vpack.c.bf16 %v560, %v559
  %v584 = vpack.c.bf16 %v562, %v561
  %v585 = vpack.c.bf16 %v564, %v563
  %v586 = vpack.c.bf16 %v566, %v565
  %v587 = vpack.c.bf16 %v568, %v567
  %v588 = vpack.c.bf16 %v570, %v569
  %v589 = vpack.c.bf16 %v572, %v571
  %v590 = vpack.c.bf16 %v574, %v573
  %v591 = vld [vmem:[%s3] sm:$0xff]
  %v592 = vld [vmem:[%s3 + $0x8] sm:$0xff]
  %v593 = vld [vmem:[%s3 + $0x10] sm:$0xff]
  %v594 = vld [vmem:[%s3 + $0x18] sm:$0xff]
  %v595 = vld [vmem:[%s3 + $0x20] sm:$0xff]
  %v596 = vld [vmem:[%s3 + $0x28] sm:$0xff]
  %v597 = vld [vmem:[%s3 + $0x30] sm:$0xff]
  %v598 = vld [vmem:[%s3 + $0x38] sm:$0xff]
  %v599 = vld [vmem:[%s3 + $0x40] sm:$0xff]
  %v600 = vld [vmem:[%s3 + $0x48] sm:$0xff]
  %v601 = vld [vmem:[%s3 + $0x50] sm:$0xff]
  %v602 = vld [vmem:[%s3 + $0x58] sm:$0xff]
  %v603 = vld [vmem:[%s3 + $0x60] sm:$0xff]
  %v604 = vld [vmem:[%s3 + $0x68] sm:$0xff]
  %v605 = vld [vmem:[%s3 + $0x70] sm:$0xff]
  %v606 = vld [vmem:[%s3 + $0x78] sm:$0xff]
  %v607 = vld [vmem:[%s3 + $0x80] sm:$0xff]
  %v608 = vld [vmem:[%s3 + $0x88] sm:$0xff]
  %v609 = vld [vmem:[%s3 + $0x90] sm:$0xff]
  %v610 = vld [vmem:[%s3 + $0x98] sm:$0xff]
  %v611 = vld [vmem:[%s3 + $0xa0] sm:$0xff]
  %v612 = vld [vmem:[%s3 + $0xa8] sm:$0xff]
  %v613 = vld [vmem:[%s3 + $0xb0] sm:$0xff]
  %v614 = vld [vmem:[%s3 + $0xb8] sm:$0xff]
  %v615 = vld [vmem:[%s3 + $0xc0] sm:$0xff]
  %v616 = vld [vmem:[%s3 + $0xc8] sm:$0xff]
  %v617 = vld [vmem:[%s3 + $0xd0] sm:$0xff]
  %v618 = vld [vmem:[%s3 + $0xd8] sm:$0xff]
  %v619 = vld [vmem:[%s3 + $0xe0] sm:$0xff]
  %v620 = vld [vmem:[%s3 + $0xe8] sm:$0xff]
  %v621 = vld [vmem:[%s3 + $0xf0] sm:$0xff]
  %v622 = vld [vmem:[%s3 + $0xf8] sm:$0xff]
  %v623 = vld [vmem:[%s4] sm:$0xff]
  %v624 = vld [vmem:[%s4 + $0x8] sm:$0xff]
  %v625 = vld [vmem:[%s4 + $0x10] sm:$0xff]
  %v626 = vld [vmem:[%s4 + $0x18] sm:$0xff]
  %v627 = vld [vmem:[%s4 + $0x20] sm:$0xff]
  %v628 = vld [vmem:[%s4 + $0x28] sm:$0xff]
  %v629 = vld [vmem:[%s4 + $0x30] sm:$0xff]
  %v630 = vld [vmem:[%s4 + $0x38] sm:$0xff]
  %v631 = vld [vmem:[%s4 + $0x40] sm:$0xff]
  %v632 = vld [vmem:[%s4 + $0x48] sm:$0xff]
  %v633 = vld [vmem:[%s4 + $0x50] sm:$0xff]
  %v634 = vld [vmem:[%s4 + $0x58] sm:$0xff]
  %v635 = vld [vmem:[%s4 + $0x60] sm:$0xff]
  %v636 = vld [vmem:[%s4 + $0x68] sm:$0xff]
  %v637 = vld [vmem:[%s4 + $0x70] sm:$0xff]
  %v638 = vld [vmem:[%s4 + $0x78] sm:$0xff]
  %v639 = vld [vmem:[%s4 + $0x80] sm:$0xff]
  %v640 = vld [vmem:[%s4 + $0x88] sm:$0xff]
  %v641 = vld [vmem:[%s4 + $0x90] sm:$0xff]
  %v642 = vld [vmem:[%s4 + $0x98] sm:$0xff]
  %v643 = vld [vmem:[%s4 + $0xa0] sm:$0xff]
  %v644 = vld [vmem:[%s4 + $0xa8] sm:$0xff]
  %v645 = vld [vmem:[%s4 + $0xb0] sm:$0xff]
  %v646 = vld [vmem:[%s4 + $0xb8] sm:$0xff]
  %v647 = vld [vmem:[%s4 + $0xc0] sm:$0xff]
  %v648 = vld [vmem:[%s4 + $0xc8] sm:$0xff]
  %v649 = vld [vmem:[%s4 + $0xd0] sm:$0xff]
  %v650 = vld [vmem:[%s4 + $0xd8] sm:$0xff]
  %v651 = vld [vmem:[%s4 + $0xe0] sm:$0xff]
  %v652 = vld [vmem:[%s4 + $0xe8] sm:$0xff]
  %v653 = vld [vmem:[%s4 + $0xf0] sm:$0xff]
  %v654 = vld [vmem:[%s4 + $0xf8] sm:$0xff]
  %656 = vset.pattern.permute.xlu0 0
  %657 = vperm.xlu0 %656, %v623
  %v658 = vpop.permute.xlu0 %657
  %661 = vset.pattern.permute.xlu0 0
  %662 = vperm.xlu0 %661, %v624
  %v663 = vpop.permute.xlu0 %662
  %666 = vset.pattern.permute.xlu0 0
  %667 = vperm.xlu0 %666, %v625
  %v668 = vpop.permute.xlu0 %667
  %671 = vset.pattern.permute.xlu0 0
  %672 = vperm.xlu0 %671, %v626
  %v673 = vpop.permute.xlu0 %672
  %676 = vset.pattern.permute.xlu0 0
  %677 = vperm.xlu0 %676, %v627
  %v678 = vpop.permute.xlu0 %677
  %681 = vset.pattern.permute.xlu0 0
  %682 = vperm.xlu0 %681, %v628
  %v683 = vpop.permute.xlu0 %682
  %686 = vset.pattern.permute.xlu0 0
  %687 = vperm.xlu0 %686, %v629
  %v688 = vpop.permute.xlu0 %687
  %691 = vset.pattern.permute.xlu0 0
  %692 = vperm.xlu0 %691, %v630
  %v693 = vpop.permute.xlu0 %692
  %696 = vset.pattern.permute.xlu0 0
  %697 = vperm.xlu0 %696, %v631
  %v698 = vpop.permute.xlu0 %697
  %701 = vset.pattern.permute.xlu0 0
  %702 = vperm.xlu0 %701, %v632
  %v703 = vpop.permute.xlu0 %702
  %706 = vset.pattern.permute.xlu0 0
  %707 = vperm.xlu0 %706, %v633
  %v708 = vpop.permute.xlu0 %707
  %711 = vset.pattern.permute.xlu0 0
  %712 = vperm.xlu0 %711, %v634
  %v713 = vpop.permute.xlu0 %712
  %716 = vset.pattern.permute.xlu0 0
  %717 = vperm.xlu0 %716, %v635
  %v718 = vpop.permute.xlu0 %717
  %721 = vset.pattern.permute.xlu0 0
  %722 = vperm.xlu0 %721, %v636
  %v723 = vpop.permute.xlu0 %722
  %726 = vset.pattern.permute.xlu0 0
  %727 = vperm.xlu0 %726, %v637
  %v728 = vpop.permute.xlu0 %727
  %731 = vset.pattern.permute.xlu0 0
  %732 = vperm.xlu0 %731, %v638
  %v733 = vpop.permute.xlu0 %732
  %736 = vset.pattern.permute.xlu0 0
  %737 = vperm.xlu0 %736, %v639
  %v738 = vpop.permute.xlu0 %737
  %741 = vset.pattern.permute.xlu0 0
  %742 = vperm.xlu0 %741, %v640
  %v743 = vpop.permute.xlu0 %742
  %746 = vset.pattern.permute.xlu0 0
  %747 = vperm.xlu0 %746, %v641
  %v748 = vpop.permute.xlu0 %747
  %751 = vset.pattern.permute.xlu0 0
  %752 = vperm.xlu0 %751, %v642
  %v753 = vpop.permute.xlu0 %752
  %756 = vset.pattern.permute.xlu0 0
  %757 = vperm.xlu0 %756, %v643
  %v758 = vpop.permute.xlu0 %757
  %761 = vset.pattern.permute.xlu0 0
  %762 = vperm.xlu0 %761, %v644
  %v763 = vpop.permute.xlu0 %762
  %766 = vset.pattern.permute.xlu0 0
  %767 = vperm.xlu0 %766, %v645
  %v768 = vpop.permute.xlu0 %767
  %771 = vset.pattern.permute.xlu0 0
  %772 = vperm.xlu0 %771, %v646
  %v773 = vpop.permute.xlu0 %772
  %776 = vset.pattern.permute.xlu0 0
  %777 = vperm.xlu0 %776, %v647
  %v778 = vpop.permute.xlu0 %777
  %781 = vset.pattern.permute.xlu0 0
  %782 = vperm.xlu0 %781, %v648
  %v783 = vpop.permute.xlu0 %782
  %786 = vset.pattern.permute.xlu0 0
  %787 = vperm.xlu0 %786, %v649
  %v788 = vpop.permute.xlu0 %787
  %791 = vset.pattern.permute.xlu0 0
  %792 = vperm.xlu0 %791, %v650
  %v793 = vpop.permute.xlu0 %792
  %796 = vset.pattern.permute.xlu0 0
  %797 = vperm.xlu0 %796, %v651
  %v798 = vpop.permute.xlu0 %797
  %801 = vset.pattern.permute.xlu0 0
  %802 = vperm.xlu0 %801, %v652
  %v803 = vpop.permute.xlu0 %802
  %806 = vset.pattern.permute.xlu0 0
  %807 = vperm.xlu0 %806, %v653
  %v808 = vpop.permute.xlu0 %807
  %811 = vset.pattern.permute.xlu0 0
  %812 = vperm.xlu0 %811, %v654
  %v813 = vpop.permute.xlu0 %812
  %v847 = vunpack.c.l.b16 %v591
  %v848 = vunpack.c.h.b16 %v591
  %v849 = vunpack.c.l.b16 %v592
  %v850 = vunpack.c.h.b16 %v592
  %v851 = vunpack.c.l.b16 %v593
  %v852 = vunpack.c.h.b16 %v593
  %v853 = vunpack.c.l.b16 %v594
  %v854 = vunpack.c.h.b16 %v594
  %v855 = vunpack.c.l.b16 %v595
  %v856 = vunpack.c.h.b16 %v595
  %v857 = vunpack.c.l.b16 %v596
  %v858 = vunpack.c.h.b16 %v596
  %v859 = vunpack.c.l.b16 %v597
  %v860 = vunpack.c.h.b16 %v597
  %v861 = vunpack.c.l.b16 %v598
  %v862 = vunpack.c.h.b16 %v598
  %v863 = vunpack.c.l.b16 %v599
  %v864 = vunpack.c.h.b16 %v599
  %v865 = vunpack.c.l.b16 %v600
  %v866 = vunpack.c.h.b16 %v600
  %v867 = vunpack.c.l.b16 %v601
  %v868 = vunpack.c.h.b16 %v601
  %v869 = vunpack.c.l.b16 %v602
  %v870 = vunpack.c.h.b16 %v602
  %v871 = vunpack.c.l.b16 %v603
  %v872 = vunpack.c.h.b16 %v603
  %v873 = vunpack.c.l.b16 %v604
  %v874 = vunpack.c.h.b16 %v604
  %v875 = vunpack.c.l.b16 %v605
  %v876 = vunpack.c.h.b16 %v605
  %v877 = vunpack.c.l.b16 %v606
  %v878 = vunpack.c.h.b16 %v606
  %v879 = vunpack.c.l.b16 %v607
  %v880 = vunpack.c.h.b16 %v607
  %v881 = vunpack.c.l.b16 %v608
  %v882 = vunpack.c.h.b16 %v608
  %v883 = vunpack.c.l.b16 %v609
  %v884 = vunpack.c.h.b16 %v609
  %v885 = vunpack.c.l.b16 %v610
  %v886 = vunpack.c.h.b16 %v610
  %v887 = vunpack.c.l.b16 %v611
  %v888 = vunpack.c.h.b16 %v611
  %v889 = vunpack.c.l.b16 %v612
  %v890 = vunpack.c.h.b16 %v612
  %v891 = vunpack.c.l.b16 %v613
  %v892 = vunpack.c.h.b16 %v613
  %v893 = vunpack.c.l.b16 %v614
  %v894 = vunpack.c.h.b16 %v614
  %v895 = vunpack.c.l.b16 %v615
  %v896 = vunpack.c.h.b16 %v615
  %v897 = vunpack.c.l.b16 %v616
  %v898 = vunpack.c.h.b16 %v616
  %v899 = vunpack.c.l.b16 %v617
  %v900 = vunpack.c.h.b16 %v617
  %v901 = vunpack.c.l.b16 %v618
  %v902 = vunpack.c.h.b16 %v618
  %v903 = vunpack.c.l.b16 %v619
  %v904 = vunpack.c.h.b16 %v619
  %v905 = vunpack.c.l.b16 %v620
  %v906 = vunpack.c.h.b16 %v620
  %v907 = vunpack.c.l.b16 %v621
  %v908 = vunpack.c.h.b16 %v621
  %v909 = vunpack.c.l.b16 %v622
  %v910 = vunpack.c.h.b16 %v622
  %v911 = vpack.c.b16 %v849, %v847
  %v912 = vpack.c.b16 %v850, %v848
  %v913 = vpack.c.b16 %v853, %v851
  %v914 = vpack.c.b16 %v854, %v852
  %v915 = vpack.c.b16 %v857, %v855
  %v916 = vpack.c.b16 %v858, %v856
  %v917 = vpack.c.b16 %v861, %v859
  %v918 = vpack.c.b16 %v862, %v860
  %v919 = vpack.c.b16 %v865, %v863
  %v920 = vpack.c.b16 %v866, %v864
  %v921 = vpack.c.b16 %v869, %v867
  %v922 = vpack.c.b16 %v870, %v868
  %v923 = vpack.c.b16 %v873, %v871
  %v924 = vpack.c.b16 %v874, %v872
  %v925 = vpack.c.b16 %v877, %v875
  %v926 = vpack.c.b16 %v878, %v876
  %v927 = vpack.c.b16 %v881, %v879
  %v928 = vpack.c.b16 %v882, %v880
  %v929 = vpack.c.b16 %v885, %v883
  %v930 = vpack.c.b16 %v886, %v884
  %v931 = vpack.c.b16 %v889, %v887
  %v932 = vpack.c.b16 %v890, %v888
  %v933 = vpack.c.b16 %v893, %v891
  %v934 = vpack.c.b16 %v894, %v892
  %v935 = vpack.c.b16 %v897, %v895
  %v936 = vpack.c.b16 %v898, %v896
  %v937 = vpack.c.b16 %v901, %v899
  %v938 = vpack.c.b16 %v902, %v900
  %v939 = vpack.c.b16 %v905, %v903
  %v940 = vpack.c.b16 %v906, %v904
  %v941 = vpack.c.b16 %v909, %v907
  %v942 = vpack.c.b16 %v910, %v908
  %975 = vmatprep.subr.bf16.mxu0 0
  %976 = vmatpush1.bf16.msra.mxu0 %v582
  %977 = vmatprep.subr.bf16.mxu0 0
  %978 = vmatpush1.bf16.msra.mxu0 %v581
  %979 = vmatprep.subr.bf16.mxu0 0
  %980 = vmatpush1.bf16.msra.mxu0 %v580
  %981 = vmatprep.subr.bf16.mxu0 0
  %982 = vmatpush1.bf16.msra.mxu0 %v579
  %983 = vmatprep.subr.bf16.mxu0 0
  %984 = vmatpush1.bf16.msra.mxu0 %v578
  %985 = vmatprep.subr.bf16.mxu0 0
  %986 = vmatpush1.bf16.msra.mxu0 %v577
  %987 = vmatprep.subr.bf16.mxu0 0
  %988 = vmatpush1.bf16.msra.mxu0 %v576
  %989 = vmatprep.subr.bf16.mxu0 0
  %990 = vmatpush1.bf16.msra.mxu0 %v575
  %991 = vmatprep.subr.bf16.mxu0 0
  %992 = vmatpush2.bf16.msra.mxu0 %v590
  %993 = vmatprep.subr.bf16.mxu0 0
  %994 = vmatpush2.bf16.msra.mxu0 %v589
  %995 = vmatprep.subr.bf16.mxu0 0
  %996 = vmatpush2.bf16.msra.mxu0 %v588
  %997 = vmatprep.subr.bf16.mxu0 0
  %998 = vmatpush2.bf16.msra.mxu0 %v587
  %999 = vmatprep.subr.bf16.mxu0 0
  %1000 = vmatpush2.bf16.msra.mxu0 %v586
  %1001 = vmatprep.subr.bf16.mxu0 0
  %1002 = vmatpush2.bf16.msra.mxu0 %v585
  %1003 = vmatprep.subr.bf16.mxu0 0
  %1004 = vmatpush2.bf16.msra.mxu0 %v584
  %1005 = vmatprep.subr.bf16.mxu0 0
  %1006 = vmatpush2.bf16.msra.mxu0 %v583
  %1007 = vmatprep.mubr.bf16.mxu0 %v912
  %1008 = vmatmul.mubr.bf16.gmra.mxu0 %v911
  %v1009 = vpop.f32.mrf.mxu0
  %v1010 = vadd.f32 %v658, %v1009
  %v1011 = vpop.f32.mrf.mxu0
  %v1012 = vpop.f32.mrf.mxu0
  %v1013 = vadd.f32 %v663, %v1012
  %v1014 = vpop.f32.mrf.mxu0
  %1015 = vmatprep.mubr.bf16.mxu0 %v914
  %1016 = vmatmul.mubr.bf16.gmra.mxu0 %v913
  %v1017 = vpop.f32.mrf.mxu0
  %v1018 = vadd.f32 %v668, %v1017
  %v1019 = vpop.f32.mrf.mxu0
  %v1020 = vpop.f32.mrf.mxu0
  %v1021 = vadd.f32 %v673, %v1020
  %v1022 = vpop.f32.mrf.mxu0
  %1023 = vmatprep.mubr.bf16.mxu0 %v916
  %1024 = vmatmul.mubr.bf16.gmra.mxu0 %v915
  %v1025 = vpop.f32.mrf.mxu0
  %v1026 = vadd.f32 %v678, %v1025
  %v1027 = vpop.f32.mrf.mxu0
  %v1028 = vpop.f32.mrf.mxu0
  %v1029 = vadd.f32 %v683, %v1028
  %v1030 = vpop.f32.mrf.mxu0
  %1031 = vmatprep.mubr.bf16.mxu0 %v918
  %1032 = vmatmul.mubr.bf16.gmra.mxu0 %v917
  %v1033 = vpop.f32.mrf.mxu0
  %v1034 = vadd.f32 %v688, %v1033
  %v1035 = vpop.f32.mrf.mxu0
  %v1036 = vpop.f32.mrf.mxu0
  %v1037 = vadd.f32 %v693, %v1036
  %v1038 = vpop.f32.mrf.mxu0
  %1039 = vmatprep.mubr.bf16.mxu0 %v920
  %1040 = vmatmul.mubr.bf16.gmra.mxu0 %v919
  %v1041 = vpop.f32.mrf.mxu0
  %v1042 = vadd.f32 %v698, %v1041
  %v1043 = vpop.f32.mrf.mxu0
  %v1044 = vpop.f32.mrf.mxu0
  %v1045 = vadd.f32 %v703, %v1044
  %v1046 = vpop.f32.mrf.mxu0
  %1047 = vmatprep.mubr.bf16.mxu0 %v922
  %1048 = vmatmul.mubr.bf16.gmra.mxu0 %v921
  %v1049 = vpop.f32.mrf.mxu0
  %v1050 = vadd.f32 %v708, %v1049
  %v1051 = vpop.f32.mrf.mxu0
  %v1052 = vpop.f32.mrf.mxu0
  %v1053 = vadd.f32 %v713, %v1052
  %v1054 = vpop.f32.mrf.mxu0
  %1055 = vmatprep.mubr.bf16.mxu0 %v924
  %1056 = vmatmul.mubr.bf16.gmra.mxu0 %v923
  %v1057 = vpop.f32.mrf.mxu0
  %v1058 = vadd.f32 %v718, %v1057
  %v1059 = vpop.f32.mrf.mxu0
  %v1060 = vpop.f32.mrf.mxu0
  %v1061 = vadd.f32 %v723, %v1060
  %v1062 = vpop.f32.mrf.mxu0
  %1063 = vmatprep.mubr.bf16.mxu0 %v926
  %1064 = vmatmul.mubr.bf16.gmra.mxu0 %v925
  %v1065 = vpop.f32.mrf.mxu0
  %v1066 = vadd.f32 %v728, %v1065
  %v1067 = vpop.f32.mrf.mxu0
  %v1068 = vpop.f32.mrf.mxu0
  %v1069 = vadd.f32 %v733, %v1068
  %v1070 = vpop.f32.mrf.mxu0
  %1071 = vmatprep.mubr.bf16.mxu0 %v928
  %1072 = vmatmul.mubr.bf16.gmra.mxu0 %v927
  %v1073 = vpop.f32.mrf.mxu0
  %v1074 = vadd.f32 %v738, %v1073
  %v1075 = vpop.f32.mrf.mxu0
  %v1076 = vpop.f32.mrf.mxu0
  %v1077 = vadd.f32 %v743, %v1076
  %v1078 = vpop.f32.mrf.mxu0
  %1079 = vmatprep.mubr.bf16.mxu0 %v930
  %1080 = vmatmul.mubr.bf16.gmra.mxu0 %v929
  %v1081 = vpop.f32.mrf.mxu0
  %v1082 = vadd.f32 %v748, %v1081
  %v1083 = vpop.f32.mrf.mxu0
  %v1084 = vpop.f32.mrf.mxu0
  %v1085 = vadd.f32 %v753, %v1084
  %v1086 = vpop.f32.mrf.mxu0
  %1087 = vmatprep.mubr.bf16.mxu0 %v932
  %1088 = vmatmul.mubr.bf16.gmra.mxu0 %v931
  %v1089 = vpop.f32.mrf.mxu0
  %v1090 = vadd.f32 %v758, %v1089
  %v1091 = vpop.f32.mrf.mxu0
  %v1092 = vpop.f32.mrf.mxu0
  %v1093 = vadd.f32 %v763, %v1092
  %v1094 = vpop.f32.mrf.mxu0
  %1095 = vmatprep.mubr.bf16.mxu0 %v934
  %1096 = vmatmul.mubr.bf16.gmra.mxu0 %v933
  %v1097 = vpop.f32.mrf.mxu0
  %v1098 = vadd.f32 %v768, %v1097
  %v1099 = vpop.f32.mrf.mxu0
  %v1100 = vpop.f32.mrf.mxu0
  %v1101 = vadd.f32 %v773, %v1100
  %v1102 = vpop.f32.mrf.mxu0
  %1103 = vmatprep.mubr.bf16.mxu0 %v936
  %1104 = vmatmul.mubr.bf16.gmra.mxu0 %v935
  %v1105 = vpop.f32.mrf.mxu0
  %v1106 = vadd.f32 %v778, %v1105
  %v1107 = vpop.f32.mrf.mxu0
  %v1108 = vpop.f32.mrf.mxu0
  %v1109 = vadd.f32 %v783, %v1108
  %v1110 = vpop.f32.mrf.mxu0
  %1111 = vmatprep.mubr.bf16.mxu0 %v938
  %1112 = vmatmul.mubr.bf16.gmra.mxu0 %v937
  %v1113 = vpop.f32.mrf.mxu0
  %v1114 = vadd.f32 %v788, %v1113
  %v1115 = vpop.f32.mrf.mxu0
  %v1116 = vpop.f32.mrf.mxu0
  %v1117 = vadd.f32 %v793, %v1116
  %v1118 = vpop.f32.mrf.mxu0
  %1119 = vmatprep.mubr.bf16.mxu0 %v940
  %1120 = vmatmul.mubr.bf16.gmra.mxu0 %v939
  %v1121 = vpop.f32.mrf.mxu0
  %v1122 = vadd.f32 %v798, %v1121
  %v1123 = vpop.f32.mrf.mxu0
  %v1124 = vpop.f32.mrf.mxu0
  %v1125 = vadd.f32 %v803, %v1124
  %v1126 = vpop.f32.mrf.mxu0
  %1127 = vmatprep.mubr.bf16.mxu0 %v942
  %1128 = vmatmul.mubr.bf16.gmra.mxu0 %v941
  %v1129 = vpop.f32.mrf.mxu0
  %v1130 = vadd.f32 %v808, %v1129
  %v1131 = vpop.f32.mrf.mxu0
  %v1132 = vpop.f32.mrf.mxu0
  %v1133 = vadd.f32 %v813, %v1132
  %v1134 = vpop.f32.mrf.mxu0
  %1135 = vdwg.mxu0
  %v1136 = vmax.f32 %v1010, 0.0
  %v1137 = vmax.f32 %v1013, 0.0
  %v1138 = vmax.f32 %v1018, 0.0
  %v1139 = vmax.f32 %v1021, 0.0
  %v1140 = vmax.f32 %v1026, 0.0
  %v1141 = vmax.f32 %v1029, 0.0
  %v1142 = vmax.f32 %v1034, 0.0
  %v1143 = vmax.f32 %v1037, 0.0
  %v1144 = vmax.f32 %v1042, 0.0
  %v1145 = vmax.f32 %v1045, 0.0
  %v1146 = vmax.f32 %v1050, 0.0
  %v1147 = vmax.f32 %v1053, 0.0
  %v1148 = vmax.f32 %v1058, 0.0
  %v1149 = vmax.f32 %v1061, 0.0
  %v1150 = vmax.f32 %v1066, 0.0
  %v1151 = vmax.f32 %v1069, 0.0
  %v1152 = vmax.f32 %v1074, 0.0
  %v1153 = vmax.f32 %v1077, 0.0
  %v1154 = vmax.f32 %v1082, 0.0
  %v1155 = vmax.f32 %v1085, 0.0
  %v1156 = vmax.f32 %v1090, 0.0
  %v1157 = vmax.f32 %v1093, 0.0
  %v1158 = vmax.f32 %v1098, 0.0
  %v1159 = vmax.f32 %v1101, 0.0
  %v1160 = vmax.f32 %v1106, 0.0
  %v1161 = vmax.f32 %v1109, 0.0
  %v1162 = vmax.f32 %v1114, 0.0
  %v1163 = vmax.f32 %v1117, 0.0
  %v1164 = vmax.f32 %v1122, 0.0
  %v1165 = vmax.f32 %v1125, 0.0
  %v1166 = vmax.f32 %v1130, 0.0
  %v1167 = vmax.f32 %v1133, 0.0
  %v1168 = vpack.c.bf16 %v1137, %v1136
  %v1169 = vpack.c.bf16 %v1139, %v1138
  %v1170 = vpack.c.bf16 %v1141, %v1140
  %v1171 = vpack.c.bf16 %v1143, %v1142
  %v1172 = vpack.c.bf16 %v1145, %v1144
  %v1173 = vpack.c.bf16 %v1147, %v1146
  %v1174 = vpack.c.bf16 %v1149, %v1148
  %v1175 = vpack.c.bf16 %v1151, %v1150
  %v1176 = vpack.c.bf16 %v1153, %v1152
  %v1177 = vpack.c.bf16 %v1155, %v1154
  %v1178 = vpack.c.bf16 %v1157, %v1156
  %v1179 = vpack.c.bf16 %v1159, %v1158
  %v1180 = vpack.c.bf16 %v1161, %v1160
  %v1181 = vpack.c.bf16 %v1163, %v1162
  %v1182 = vpack.c.bf16 %v1165, %v1164
  %v1183 = vpack.c.bf16 %v1167, %v1166
  %v1184 = vld [vmem:[%s5] sm:$0xff]
  %v1186 = vunpack.c.l.b16 %v1184
  %v1187 = vunpack.c.h.b16 %v1184
  %v1188 = vpack.c.b16 %v1186, %v1186
  %v1189 = vpack.c.b16 %v1187, %v1187
  %1192 = vmatprep.subr.bf16.mxu0 0
  %1193 = vmatpush1.bf16.msra.mxu0 %v1175
  %1194 = vmatprep.subr.bf16.mxu0 0
  %1195 = vmatpush1.bf16.msra.mxu0 %v1174
  %1196 = vmatprep.subr.bf16.mxu0 0
  %1197 = vmatpush1.bf16.msra.mxu0 %v1173
  %1198 = vmatprep.subr.bf16.mxu0 0
  %1199 = vmatpush1.bf16.msra.mxu0 %v1172
  %1200 = vmatprep.subr.bf16.mxu0 0
  %1201 = vmatpush1.bf16.msra.mxu0 %v1171
  %1202 = vmatprep.subr.bf16.mxu0 0
  %1203 = vmatpush1.bf16.msra.mxu0 %v1170
  %1204 = vmatprep.subr.bf16.mxu0 0
  %1205 = vmatpush1.bf16.msra.mxu0 %v1169
  %1206 = vmatprep.subr.bf16.mxu0 0
  %1207 = vmatpush1.bf16.msra.mxu0 %v1168
  %1208 = vmatprep.subr.bf16.mxu0 0
  %1209 = vmatpush2.bf16.msra.mxu0 %v1183
  %1210 = vmatprep.subr.bf16.mxu0 0
  %1211 = vmatpush2.bf16.msra.mxu0 %v1182
  %1212 = vmatprep.subr.bf16.mxu0 0
  %1213 = vmatpush2.bf16.msra.mxu0 %v1181
  %1214 = vmatprep.subr.bf16.mxu0 0
  %1215 = vmatpush2.bf16.msra.mxu0 %v1180
  %1216 = vmatprep.subr.bf16.mxu0 0
  %1217 = vmatpush2.bf16.msra.mxu0 %v1179
  %1218 = vmatprep.subr.bf16.mxu0 0
  %1219 = vmatpush2.bf16.msra.mxu0 %v1178
  %1220 = vmatprep.subr.bf16.mxu0 0
  %1221 = vmatpush2.bf16.msra.mxu0 %v1177
  %1222 = vmatprep.subr.bf16.mxu0 0
  %1223 = vmatpush2.bf16.msra.mxu0 %v1176
  %1224 = vmatprep.mubr.bf16.mxu0 %v1189
  %1225 = vmatmul.mubr.bf16.gmra.mxu0 %v1188
  %v1226 = vpop.f32.mrf.mxu0
  %v1227 = vadd.f32 0.0, %v1226
  %v1228 = vpop.f32.mrf.mxu0
  %v1229 = vpop.f32.mrf.mxu0
  %v1230 = vpop.f32.mrf.mxu0
  %1231 = vdwg.mxu0
  %1232 = vst [vmem:[%s6] sm:$0xff] %v1227
  // Predicated region
  $region26: #{nam_forward.1} parent=0 // pred_check
    _
  $region27: #{nam_forward.1} parent=0 // pred_check_branch
    %1234 = sbr.rel (0) target = $region29
  $region28: #{nam_forward.1} parent=0 // pred_region
    _
  $region29: #{nam_forward.1} parent=0 // pred_fallthru
    _
  // Predicated region
  $region30: #{nam_forward.1} parent=0 // pred_check
    _
  $region31: #{nam_forward.1} parent=0 // pred_check_branch
    %1236 = sbr.rel (0) target = $region33
  $region32: #{nam_forward.1} parent=0 // pred_region
    _
  $region33: #{nam_forward.1} parent=0 // pred_fallthru
    _

</llo_original>
